<compile_context>
chip_gen: v6e
topology: v6e:2x2x1
jax: 0.10.0
libtpu: 0.0.40
codegen_flags: <defaults>
</compile_context>

<pallas_src>
import jax
import jax.numpy as jnp
from jax.experimental import pallas as pl
from jax.experimental.pallas import tpu as pltpu

STATE_DIM = 4
HIDDEN_DIM = 64
ACTION_DIM = 4

_SUB = 8      # f32 sublane granule
_LANE = 128   # lane granule


def _round_up(n, m):
    return ((n + m - 1) // m) * m


def dqn_kernel(x_ref, w1_ref, b1_ref, w2_ref, b2_ref, w3_ref, b3_ref, o_ref):
    # Feature-major: batch lives on the lane axis of every operand.
    x = x_ref[...]                                                  # [8, TB] (rows 4..7 are zero)

    # fc1 + relu:  [64, 8] @ [8, TB] -> [64, TB]   (MXU, f32 accumulate)
    h1 = jnp.dot(w1_ref[...], x, preferred_element_type=jnp.float32) + b1_ref[...]
    h1 = jnp.maximum(h1, 0.0)

    # fc2 + relu:  [64, 64] @ [64, TB] -> [64, TB]
    h2 = jnp.dot(w2_ref[...], h1, preferred_element_type=jnp.float32) + b2_ref[...]
    h2 = jnp.maximum(h2, 0.0)

    # fc3 (no activation):  [8, 64] @ [64, TB] -> [8, TB]
    # Rows 4..7 of w3/b3 are zero, so output rows 4..7 are exactly zero and get
    # sliced off in the wrapper.  Full 8-sublane, lane-dense store.
    o_ref[...] = jnp.dot(w3_ref[...], h2, preferred_element_type=jnp.float32) + b3_ref[...]


def dqn_forward(x, params, *, tb=4096):
    """x: [B, STATE_DIM] float32 -> [B, ACTION_DIM] float32.

    params are in PyTorch nn.Linear layout: w [out, in], b [out].
    """
    w1, b1, w2, b2, w3, b3 = params
    B = x.shape[0]

    # Batch tile on the lane axis: always a multiple of 128, capped at `tb`.
    TB = max(_LANE, min(_round_up(tb, _LANE), _round_up(max(B, 1), _LANE)))
    padded_B = _round_up(B, TB)
    grid = (padded_B // TB,)

    # Feature-major activation, feature dim zero-padded 4 -> 8, batch padded to
    # a multiple of TB.  Transpose + pad fuse into one small XLA pass over x.
    xT = jnp.pad(x.astype(jnp.float32).T,
                 ((0, _SUB - STATE_DIM), (0, padded_B - B)))        # [8, padded_B]

    # Weights in PyTorch [out, in] layout; pad the tiny 4-wide dims to 8 so all
    # blocks are cleanly (8,128)-tileable and the K=4 contraction sees zeros.
    w1p = jnp.pad(w1.astype(jnp.float32), ((0, 0), (0, _SUB - STATE_DIM)))       # [64, 8]
    b1c = b1.astype(jnp.float32).reshape(HIDDEN_DIM, 1)                          # [64, 1]
    w2f = w2.astype(jnp.float32)                                                 # [64, 64]
    b2c = b2.astype(jnp.float32).reshape(HIDDEN_DIM, 1)                          # [64, 1]
    w3p = jnp.pad(w3.astype(jnp.float32), ((0, _SUB - ACTION_DIM), (0, 0)))      # [8, 64]
    b3c = jnp.pad(b3.astype(jnp.float32).reshape(ACTION_DIM, 1),
                  ((0, _SUB - ACTION_DIM), (0, 0)))                              # [8, 1]

    # Weights/biases: full-array blocks with a constant index_map -> loaded once
    # and VMEM-resident across all grid steps.
    def resident(a):
        return pl.BlockSpec(a.shape, lambda i: (0, 0), memory_space=pltpu.VMEM)

    outT = pl.pallas_call(
        dqn_kernel,
        out_shape=jax.ShapeDtypeStruct((_SUB, padded_B), jnp.float32),
        grid=grid,
        in_specs=[
            pl.BlockSpec((_SUB, TB), lambda i: (0, i)),   # streamed x^T tile
            resident(w1p), resident(b1c),
            resident(w2f), resident(b2c),
            resident(w3p), resident(b3c),
        ],
        out_specs=pl.BlockSpec((_SUB, TB), lambda i: (0, i)),
        compiler_params=pltpu.CompilerParams(
            dimension_semantics=("parallel",)),
    )(xT, w1p, b1c, w2f, b2c, w3p, b3c)

    return outT[:ACTION_DIM, :B].T


def init_params(key):
    """Deterministic init mirroring nn.Linear: w [out, in], b [out]."""
    ks = jax.random.split(key, 6)

    def linear(kw, kb, fan_in, fan_out):
        bound = 1.0 / jnp.sqrt(float(fan_in))
        w = jax.random.uniform(kw, (fan_out, fan_in), jnp.float32, -bound, bound)
        b = jax.random.uniform(kb, (fan_out,), jnp.float32, -bound, bound)
        return w, b

    w1, b1 = linear(ks[0], ks[1], STATE_DIM, HIDDEN_DIM)
    w2, b2 = linear(ks[2], ks[3], HIDDEN_DIM, HIDDEN_DIM)
    w3, b3 = linear(ks[4], ks[5], HIDDEN_DIM, ACTION_DIM)
    return (w1, b1, w2, b2, w3, b3)


def dqn_ref(x, params):
    w1, b1, w2, b2, w3, b3 = params
    h1 = jnp.maximum(x @ w1.T + b1, 0.0)
    h2 = jnp.maximum(h1 @ w2.T + b2, 0.0)
    return h2 @ w3.T + b3


if __name__ == "__main__":
    key = jax.random.PRNGKey(0)
    k_x, k_x2, k_p = jax.random.split(key, 3)
    params = init_params(k_p)

    # Small batch (single tile, padded up to one 128-lane tile).
    B_small = 8
    x_small = jax.random.normal(k_x, (B_small, STATE_DIM), dtype=jnp.float32)
    out_small = jax.block_until_ready(dqn_forward(x_small, params))
    ref_small = dqn_ref(x_small, params)
    assert out_small.shape == (B_small, ACTION_DIM)
    assert jnp.allclose(out_small, ref_small, atol=1e-5, rtol=1e-5)

    # Larger batch: default tile (single grid step here) ...
    B_big = 1000
    x_big = jax.random.normal(k_x2, (B_big, STATE_DIM), dtype=jnp.float32)
    out_big = jax.block_until_ready(dqn_forward(x_big, params))
    ref_big = dqn_ref(x_big, params)
    assert out_big.shape == (B_big, ACTION_DIM)
    assert jnp.allclose(out_big, ref_big, atol=1e-5, rtol=1e-5)

    # ... and a small explicit tile to exercise a multi-step grid plus a
    # zero-padded partial last tile (1000 -> 1024 lanes, 4 grid steps).
    out_big2 = jax.block_until_ready(dqn_forward(x_big, params, tb=256))
    assert out_big2.shape == (B_big, ACTION_DIM)
    assert jnp.allclose(out_big2, ref_big, atol=1e-5, rtol=1e-5)

    print("KERNEL_OK")
</pallas_src>

<mosaic_0001>
module attributes {stable_mosaic.version = 11 : i64} {
  func.func @dqn_kernel(%arg0: i32, %arg1: memref<8x128xf32, #tpu.memory_space<vmem>>, %arg2: memref<64x8xf32, #tpu.memory_space<vmem>>, %arg3: memref<64x1xf32, #tpu.memory_space<vmem>>, %arg4: memref<64x64xf32, #tpu.memory_space<vmem>>, %arg5: memref<64x1xf32, #tpu.memory_space<vmem>>, %arg6: memref<8x64xf32, #tpu.memory_space<vmem>>, %arg7: memref<8x1xf32, #tpu.memory_space<vmem>>, %arg8: memref<8x128xf32, #tpu.memory_space<vmem>>) attributes {dimension_semantics = [#tpu.dimension_semantics<parallel>], iteration_bounds = array<i64: 1>, scalar_prefetch = 0 : i64, scratch_operands = 0 : i64, tpu.core_type = #tpu.core_type<tc>, window_params = [{transform_indices = @transform_0, window_bounds = array<i64: 8, 128>}, {pipeline_mode = #tpu.pipeline_mode<synchronous>, transform_indices = @transform_1, window_bounds = array<i64: 64, 8>}, {pipeline_mode = #tpu.pipeline_mode<synchronous>, transform_indices = @transform_2, window_bounds = array<i64: 64, 1>}, {pipeline_mode = #tpu.pipeline_mode<synchronous>, transform_indices = @transform_3, window_bounds = array<i64: 64, 64>}, {pipeline_mode = #tpu.pipeline_mode<synchronous>, transform_indices = @transform_4, window_bounds = array<i64: 64, 1>}, {pipeline_mode = #tpu.pipeline_mode<synchronous>, transform_indices = @transform_5, window_bounds = array<i64: 8, 64>}, {pipeline_mode = #tpu.pipeline_mode<synchronous>, transform_indices = @transform_6, window_bounds = array<i64: 8, 1>}, {transform_indices = @transform_7, window_bounds = array<i64: 8, 128>}]} {
    %c0 = arith.constant 0 : index
    %c0_0 = arith.constant 0 : index
    %0 = vector.load %arg1[%c0, %c0_0] : memref<8x128xf32, #tpu.memory_space<vmem>>, vector<8x128xf32>
    %c0_1 = arith.constant 0 : index
    %c0_2 = arith.constant 0 : index
    %1 = vector.load %arg2[%c0_1, %c0_2] : memref<64x8xf32, #tpu.memory_space<vmem>>, vector<64x8xf32>
    %cst = arith.constant dense<0.000000e+00> : vector<64x128xf32>
    %2 = tpu.matmul %1, %0, %cst {dimension_numbers = #tpu.dot_dimension_numbers<[1], [0], [0], [1], [0, 0, 1, 1], [], []>} : vector<64x8xf32>, vector<8x128xf32>, vector<64x128xf32> -> vector<64x128xf32>
    %c0_3 = arith.constant 0 : index
    %c0_4 = arith.constant 0 : index
    %3 = vector.load %arg3[%c0_3, %c0_4] : memref<64x1xf32, #tpu.memory_space<vmem>>, vector<64x1xf32>
    %4 = vector.broadcast %3 : vector<64x1xf32> to vector<64x128xf32>
    %5 = arith.addf %2, %4 : vector<64x128xf32>
    %cst_5 = arith.constant 0.000000e+00 : f32
    %6 = vector.broadcast %cst_5 : f32 to vector<64x128xf32>
    %7 = arith.maximumf %5, %6 : vector<64x128xf32>
    %c0_6 = arith.constant 0 : index
    %c0_7 = arith.constant 0 : index
    %8 = vector.load %arg4[%c0_6, %c0_7] : memref<64x64xf32, #tpu.memory_space<vmem>>, vector<64x64xf32>
    %cst_8 = arith.constant dense<0.000000e+00> : vector<64x128xf32>
    %9 = tpu.matmul %8, %7, %cst_8 {dimension_numbers = #tpu.dot_dimension_numbers<[1], [0], [0], [1], [0, 0, 1, 1], [], []>} : vector<64x64xf32>, vector<64x128xf32>, vector<64x128xf32> -> vector<64x128xf32>
    %c0_9 = arith.constant 0 : index
    %c0_10 = arith.constant 0 : index
    %10 = vector.load %arg5[%c0_9, %c0_10] : memref<64x1xf32, #tpu.memory_space<vmem>>, vector<64x1xf32>
    %11 = vector.broadcast %10 : vector<64x1xf32> to vector<64x128xf32>
    %12 = arith.addf %9, %11 : vector<64x128xf32>
    %cst_11 = arith.constant 0.000000e+00 : f32
    %13 = vector.broadcast %cst_11 : f32 to vector<64x128xf32>
    %14 = arith.maximumf %12, %13 : vector<64x128xf32>
    %c0_12 = arith.constant 0 : index
    %c0_13 = arith.constant 0 : index
    %15 = vector.load %arg6[%c0_12, %c0_13] : memref<8x64xf32, #tpu.memory_space<vmem>>, vector<8x64xf32>
    %cst_14 = arith.constant dense<0.000000e+00> : vector<8x128xf32>
    %16 = tpu.matmul %15, %14, %cst_14 {dimension_numbers = #tpu.dot_dimension_numbers<[1], [0], [0], [1], [0, 0, 1, 1], [], []>} : vector<8x64xf32>, vector<64x128xf32>, vector<8x128xf32> -> vector<8x128xf32>
    %c0_15 = arith.constant 0 : index
    %c0_16 = arith.constant 0 : index
    %17 = vector.load %arg7[%c0_15, %c0_16] : memref<8x1xf32, #tpu.memory_space<vmem>>, vector<8x1xf32>
    %18 = vector.broadcast %17 : vector<8x1xf32> to vector<8x128xf32>
    %19 = arith.addf %16, %18 : vector<8x128xf32>
    %c0_17 = arith.constant 0 : index
    %c0_18 = arith.constant 0 : index
    %20 = vector.load %arg8[%c0_17, %c0_18] : memref<8x128xf32, #tpu.memory_space<vmem>>, vector<8x128xf32>
    tpu.vector_store %arg8[%c0_17, %c0_18], %19 {strides = array<i32>} : memref<8x128xf32, #tpu.memory_space<vmem>>, vector<8x128xf32>,
    return
  }
  func.func @transform_0(%arg0: i32) -> (i32, i32) {
    %c0_i32 = arith.constant 0 : i32
    %c0_i32_0 = arith.constant 0 : i32
    return %c0_i32, %arg0 : i32, i32
  }
  func.func @transform_1(%arg0: i32) -> (i32, i32) {
    %c0_i32 = arith.constant 0 : i32
    %c0_i32_0 = arith.constant 0 : i32
    %c0_i32_1 = arith.constant 0 : i32
    return %c0_i32, %c0_i32_0 : i32, i32
  }
  func.func @transform_2(%arg0: i32) -> (i32, i32) {
    %c0_i32 = arith.constant 0 : i32
    %c0_i32_0 = arith.constant 0 : i32
    %c0_i32_1 = arith.constant 0 : i32
    return %c0_i32, %c0_i32_0 : i32, i32
  }
  func.func @transform_3(%arg0: i32) -> (i32, i32) {
    %c0_i32 = arith.constant 0 : i32
    %c0_i32_0 = arith.constant 0 : i32
    %c0_i32_1 = arith.constant 0 : i32
    return %c0_i32, %c0_i32_0 : i32, i32
  }
  func.func @transform_4(%arg0: i32) -> (i32, i32) {
    %c0_i32 = arith.constant 0 : i32
    %c0_i32_0 = arith.constant 0 : i32
    %c0_i32_1 = arith.constant 0 : i32
    return %c0_i32, %c0_i32_0 : i32, i32
  }
  func.func @transform_5(%arg0: i32) -> (i32, i32) {
    %c0_i32 = arith.constant 0 : i32
    %c0_i32_0 = arith.constant 0 : i32
    %c0_i32_1 = arith.constant 0 : i32
    return %c0_i32, %c0_i32_0 : i32, i32
  }
  func.func @transform_6(%arg0: i32) -> (i32, i32) {
    %c0_i32 = arith.constant 0 : i32
    %c0_i32_0 = arith.constant 0 : i32
    %c0_i32_1 = arith.constant 0 : i32
    return %c0_i32, %c0_i32_0 : i32, i32
  }
  func.func @transform_7(%arg0: i32) -> (i32, i32) {
    %c0_i32 = arith.constant 0 : i32
    %c0_i32_0 = arith.constant 0 : i32
    return %c0_i32, %arg0 : i32, i32
  }
}

</mosaic_0001>

<llo_original>
// kernel: tpu_custom_call.1
$region0: #{tpu_custom_call.1}
  #allocation0 [shape = 'u32[]', space=smem, size = 0x4, offset = 0x4, fixed_abs, tag = 'smem constant byte address 0x4 - core index']
  #allocation1 [shape = 'u32[144,128]{1,0:T(1,128)}', space=vmem, size = 0x12000, scoped, tag = 'internal scratch']
  %s0 = inlined_call_operand.vmem [shape: f32[8,128], index: 0, kind: input, shape index: {}]
  %s1 = inlined_call_operand.vmem [shape: f32[64,8], index: 1, kind: input, shape index: {}]
  %s2 = inlined_call_operand.vmem [shape: f32[64,1], index: 2, kind: input, shape index: {}]
  %s3 = inlined_call_operand.vmem [shape: f32[64,64], index: 3, kind: input, shape index: {}]
  %s4 = inlined_call_operand.vmem [shape: f32[64,1], index: 4, kind: input, shape index: {}]
  %s5 = inlined_call_operand.vmem [shape: f32[8,64], index: 5, kind: input, shape index: {}]
  %s6 = inlined_call_operand.vmem [shape: f32[8,1], index: 6, kind: input, shape index: {}]
  %s7 = inlined_call_operand.hbm [shape: f32[8,128], index: 7, kind: output, shape index: {}]
  %s8 = sld [smem:[#allocation0]]
  $region38: #{tpu_custom_call.1} parent=0
    _
  %s10 = ssub.s32 1, %s8
  %s11 = scalar_select 0, %s10, %s8
  $region1: #{tpu_custom_call.1} parent=0
    #allocation2 [shape = 'u8[4096]{0}', space=vmem, size = 0x1000, scoped, tag = 'output window, operand 0, single buffered']
    #allocation3 [shape = 's32[1]{0}', space=sflag, size = 0x4, scoped, tag = 'scoped memory for tpu_custom_call.1']
    %12 = vsyncpa [#allocation3], 0
    // Predicated region
    $region2: #{tpu_custom_call.1} parent=1 // pred_check
      _
    $region3: #{tpu_custom_call.1} parent=1 // pred_check_branch
      %14 = sbr.rel (0) target = $region5
    $region4: #{tpu_custom_call.1} parent=1 // pred_region
      _
    $region5: #{tpu_custom_call.1} parent=1 // pred_fallthru
      _
    // Predicated region
    $region6: #{tpu_custom_call.1} parent=1 // pred_check
      _
    $region7: #{tpu_custom_call.1} parent=1 // pred_check_branch
      %16 = sbr.rel (0) target = $region9
    $region8: #{tpu_custom_call.1} parent=1 // pred_region
      _
    $region9: #{tpu_custom_call.1} parent=1 // pred_fallthru
      _
    // Predicated region
    $region10: #{tpu_custom_call.1} parent=1 // pred_check
      _
    $region11: #{tpu_custom_call.1} parent=1 // pred_check_branch
      %18 = sbr.rel (0) target = $region13
    $region12: #{tpu_custom_call.1} parent=1 // pred_region
      _
    $region13: #{tpu_custom_call.1} parent=1 // pred_fallthru
      _
    // Predicated region
    $region14: #{tpu_custom_call.1} parent=1 // pred_check
      _
    $region15: #{tpu_custom_call.1} parent=1 // pred_check_branch
      %20 = sbr.rel (0) target = $region17
    $region16: #{tpu_custom_call.1} parent=1 // pred_region
      _
    $region17: #{tpu_custom_call.1} parent=1 // pred_fallthru
      _
    // Predicated region
    $region18: #{tpu_custom_call.1} parent=1 // pred_check
      _
    $region19: #{tpu_custom_call.1} parent=1 // pred_check_branch
      %22 = sbr.rel (0) target = $region21
    $region20: #{tpu_custom_call.1} parent=1 // pred_region
      _
    $region21: #{tpu_custom_call.1} parent=1 // pred_fallthru
      _
    // Predicated region
    $region22: #{tpu_custom_call.1} parent=1 // pred_check
      _
    $region23: #{tpu_custom_call.1} parent=1 // pred_check_branch
      %24 = sbr.rel (0) target = $region25
    $region24: #{tpu_custom_call.1} parent=1 // pred_region
      _
    $region25: #{tpu_custom_call.1} parent=1 // pred_fallthru
      _
    // Predicated region
    $region26: #{tpu_custom_call.1} parent=1 // pred_check
      _
    $region27: #{tpu_custom_call.1} parent=1 // pred_check_branch
      %26 = sbr.rel (0) target = $region29
    $region28: #{tpu_custom_call.1} parent=1 // pred_region
      _
    $region29: #{tpu_custom_call.1} parent=1 // pred_fallthru
      _
    %v27 = vld [vmem:[%s0] sm:$0xff]
    %v28 = vld [vmem:[%s1] sm:$0xff]
    %v29 = vld [vmem:[%s1 + $0x8] sm:$0xff]
    %v30 = vld [vmem:[%s1 + $0x10] sm:$0xff]
    %v31 = vld [vmem:[%s1 + $0x18] sm:$0xff]
    %v32 = vld [vmem:[%s1 + $0x20] sm:$0xff]
    %v33 = vld [vmem:[%s1 + $0x28] sm:$0xff]
    %v34 = vld [vmem:[%s1 + $0x30] sm:$0xff]
    %v35 = vld [vmem:[%s1 + $0x38] sm:$0xff]
    %v36 = vld [vmem:[%s2] sm:$0xff]
    %v37 = vld [vmem:[%s2 + $0x8] sm:$0xff]
    %v38 = vld [vmem:[%s2 + $0x10] sm:$0xff]
    %v39 = vld [vmem:[%s2 + $0x18] sm:$0xff]
    %v40 = vld [vmem:[%s2 + $0x20] sm:$0xff]
    %v41 = vld [vmem:[%s2 + $0x28] sm:$0xff]
    %v42 = vld [vmem:[%s2 + $0x30] sm:$0xff]
    %v43 = vld [vmem:[%s2 + $0x38] sm:$0xff]
    %45 = vset.pattern.permute.xlu0 0
    %46 = vperm.xlu0 %45, %v36
    %v47 = vpop.permute.xlu0 %46
    %50 = vset.pattern.permute.xlu0 0
    %51 = vperm.xlu0 %50, %v37
    %v52 = vpop.permute.xlu0 %51
    %55 = vset.pattern.permute.xlu0 0
    %56 = vperm.xlu0 %55, %v38
    %v57 = vpop.permute.xlu0 %56
    %60 = vset.pattern.permute.xlu0 0
    %61 = vperm.xlu0 %60, %v39
    %v62 = vpop.permute.xlu0 %61
    %65 = vset.pattern.permute.xlu0 0
    %66 = vperm.xlu0 %65, %v40
    %v67 = vpop.permute.xlu0 %66
    %70 = vset.pattern.permute.xlu0 0
    %71 = vperm.xlu0 %70, %v41
    %v72 = vpop.permute.xlu0 %71
    %75 = vset.pattern.permute.xlu0 0
    %76 = vperm.xlu0 %75, %v42
    %v77 = vpop.permute.xlu0 %76
    %80 = vset.pattern.permute.xlu0 0
    %81 = vperm.xlu0 %80, %v43
    %v82 = vpop.permute.xlu0 %81
    %vm84 = vcmask 64512
    %v86 = vsel %vm84, %v28, 0
    %v89 = vsel %vm84, %v29, 0
    %v92 = vsel %vm84, %v30, 0
    %v95 = vsel %vm84, %v31, 0
    %v98 = vsel %vm84, %v32, 0
    %v101 = vsel %vm84, %v33, 0
    %v104 = vsel %vm84, %v34, 0
    %v107 = vsel %vm84, %v35, 0
    %109 = vmatprep.subr.mxu0 0.0
    %110 = vmatpush1.msra.mxu0 0.0
    %111 = vmatprep.subr.mxu0 0.0
    %112 = vmatpush1.msra.mxu0 0.0
    %113 = vmatprep.subr.mxu0 0.0
    %114 = vmatpush1.msra.mxu0 0.0
    %115 = vmatprep.subr.mxu0 0.0
    %116 = vmatpush1.msra.mxu0 0.0
    %117 = vmatprep.subr.mxu0 0.0
    %118 = vmatpush1.msra.mxu0 0.0
    %119 = vmatprep.subr.mxu0 0.0
    %120 = vmatpush1.msra.mxu0 0.0
    %121 = vmatprep.subr.mxu0 0.0
    %122 = vmatpush1.msra.mxu0 0.0
    %123 = vmatprep.subr.mxu0 0.0
    %124 = vmatpush1.msra.mxu0 0.0
    %125 = vmatprep.subr.mxu0 0.0
    %126 = vmatpush1.msra.mxu0 0.0
    %127 = vmatprep.subr.mxu0 0.0
    %128 = vmatpush1.msra.mxu0 0.0
    %129 = vmatprep.subr.mxu0 0.0
    %130 = vmatpush1.msra.mxu0 0.0
    %131 = vmatprep.subr.mxu0 0.0
    %132 = vmatpush1.msra.mxu0 0.0
    %133 = vmatprep.subr.mxu0 0.0
    %134 = vmatpush1.msra.mxu0 0.0
    %135 = vmatprep.subr.mxu0 0.0
    %136 = vmatpush1.msra.mxu0 0.0
    %137 = vmatprep.subr.mxu0 0.0
    %138 = vmatpush1.msra.mxu0 0.0
    %139 = vmatprep.subr.mxu0 0.0
    %140 = vmatpush1.msra.mxu0 %v27
    %141 = vmatprep.subr.mxu0 0.0
    %142 = vmatpush2.msra.mxu0 0.0
    %143 = vmatprep.subr.mxu0 0.0
    %144 = vmatpush2.msra.mxu0 0.0
    %145 = vmatprep.subr.mxu0 0.0
    %146 = vmatpush2.msra.mxu0 0.0
    %147 = vmatprep.subr.mxu0 0.0
    %148 = vmatpush2.msra.mxu0 0.0
    %149 = vmatprep.subr.mxu0 0.0
    %150 = vmatpush2.msra.mxu0 0.0
    %151 = vmatprep.subr.mxu0 0.0
    %152 = vmatpush2.msra.mxu0 0.0
    %153 = vmatprep.subr.mxu0 0.0
    %154 = vmatpush2.msra.mxu0 0.0
    %155 = vmatprep.subr.mxu0 0.0
    %156 = vmatpush2.msra.mxu0 0.0
    %157 = vmatprep.subr.mxu0 0.0
    %158 = vmatpush2.msra.mxu0 0.0
    %159 = vmatprep.subr.mxu0 0.0
    %160 = vmatpush2.msra.mxu0 0.0
    %161 = vmatprep.subr.mxu0 0.0
    %162 = vmatpush2.msra.mxu0 0.0
    %163 = vmatprep.subr.mxu0 0.0
    %164 = vmatpush2.msra.mxu0 0.0
    %165 = vmatprep.subr.mxu0 0.0
    %166 = vmatpush2.msra.mxu0 0.0
    %167 = vmatprep.subr.mxu0 0.0
    %168 = vmatpush2.msra.mxu0 0.0
    %169 = vmatprep.subr.mxu0 0.0
    %170 = vmatpush2.msra.mxu0 0.0
    %171 = vmatprep.subr.mxu0 0.0
    %172 = vmatpush2.msra.mxu0 0.0
    %173 = vmatprep.mubr.f32.mxu0 0.0
    %174 = vmatmul.mubr.f32.gmra.mxu0 %v86
    %v175 = vpop.f32.mrf.mxu0
    %v176 = vadd.f32 %v47, %v175
    %v177 = vpop.f32.mrf.mxu0
    %178 = vmatprep.mubr.f32.mxu0 0.0
    %179 = vmatmul.mubr.f32.gmra.mxu0 %v89
    %v180 = vpop.f32.mrf.mxu0
    %v181 = vadd.f32 %v52, %v180
    %v182 = vpop.f32.mrf.mxu0
    %183 = vmatprep.mubr.f32.mxu0 0.0
    %184 = vmatmul.mubr.f32.gmra.mxu0 %v92
    %v185 = vpop.f32.mrf.mxu0
    %v186 = vadd.f32 %v57, %v185
    %v187 = vpop.f32.mrf.mxu0
    %188 = vmatprep.mubr.f32.mxu0 0.0
    %189 = vmatmul.mubr.f32.gmra.mxu0 %v95
    %v190 = vpop.f32.mrf.mxu0
    %v191 = vadd.f32 %v62, %v190
    %v192 = vpop.f32.mrf.mxu0
    %193 = vmatprep.mubr.f32.mxu0 0.0
    %194 = vmatmul.mubr.f32.gmra.mxu0 %v98
    %v195 = vpop.f32.mrf.mxu0
    %v196 = vadd.f32 %v67, %v195
    %v197 = vpop.f32.mrf.mxu0
    %198 = vmatprep.mubr.f32.mxu0 0.0
    %199 = vmatmul.mubr.f32.gmra.mxu0 %v101
    %v200 = vpop.f32.mrf.mxu0
    %v201 = vadd.f32 %v72, %v200
    %v202 = vpop.f32.mrf.mxu0
    %203 = vmatprep.mubr.f32.mxu0 0.0
    %204 = vmatmul.mubr.f32.gmra.mxu0 %v104
    %v205 = vpop.f32.mrf.mxu0
    %v206 = vadd.f32 %v77, %v205
    %v207 = vpop.f32.mrf.mxu0
    %208 = vmatprep.mubr.f32.mxu0 0.0
    %209 = vmatmul.mubr.f32.gmra.mxu0 %v107
    %v210 = vpop.f32.mrf.mxu0
    %v211 = vadd.f32 %v82, %v210
    %v212 = vpop.f32.mrf.mxu0
    %213 = vdwg.mxu0
    %v214 = vmax.f32 %v176, 0.0
    %v215 = vmax.f32 %v181, 0.0
    %v216 = vmax.f32 %v186, 0.0
    %v217 = vmax.f32 %v191, 0.0
    %v218 = vmax.f32 %v196, 0.0
    %v219 = vmax.f32 %v201, 0.0
    %v220 = vmax.f32 %v206, 0.0
    %v221 = vmax.f32 %v211, 0.0
    %v222 = vld [vmem:[%s3] sm:$0xff]
    %v223 = vld [vmem:[%s3 + $0x8] sm:$0xff]
    %v224 = vld [vmem:[%s3 + $0x10] sm:$0xff]
    %v225 = vld [vmem:[%s3 + $0x18] sm:$0xff]
    %v226 = vld [vmem:[%s3 + $0x20] sm:$0xff]
    %v227 = vld [vmem:[%s3 + $0x28] sm:$0xff]
    %v228 = vld [vmem:[%s3 + $0x30] sm:$0xff]
    %v229 = vld [vmem:[%s3 + $0x38] sm:$0xff]
    %v230 = vld [vmem:[%s4] sm:$0xff]
    %v231 = vld [vmem:[%s4 + $0x8] sm:$0xff]
    %v232 = vld [vmem:[%s4 + $0x10] sm:$0xff]
    %v233 = vld [vmem:[%s4 + $0x18] sm:$0xff]
    %v234 = vld [vmem:[%s4 + $0x20] sm:$0xff]
    %v235 = vld [vmem:[%s4 + $0x28] sm:$0xff]
    %v236 = vld [vmem:[%s4 + $0x30] sm:$0xff]
    %v237 = vld [vmem:[%s4 + $0x38] sm:$0xff]
    %239 = vset.pattern.permute.xlu0 0
    %240 = vperm.xlu0 %239, %v230
    %v241 = vpop.permute.xlu0 %240
    %244 = vset.pattern.permute.xlu0 0
    %245 = vperm.xlu0 %244, %v231
    %v246 = vpop.permute.xlu0 %245
    %249 = vset.pattern.permute.xlu0 0
    %250 = vperm.xlu0 %249, %v232
    %v251 = vpop.permute.xlu0 %250
    %254 = vset.pattern.permute.xlu0 0
    %255 = vperm.xlu0 %254, %v233
    %v256 = vpop.permute.xlu0 %255
    %259 = vset.pattern.permute.xlu0 0
    %260 = vperm.xlu0 %259, %v234
    %v261 = vpop.permute.xlu0 %260
    %264 = vset.pattern.permute.xlu0 0
    %265 = vperm.xlu0 %264, %v235
    %v266 = vpop.permute.xlu0 %265
    %269 = vset.pattern.permute.xlu0 0
    %270 = vperm.xlu0 %269, %v236
    %v271 = vpop.permute.xlu0 %270
    %274 = vset.pattern.permute.xlu0 0
    %275 = vperm.xlu0 %274, %v237
    %v276 = vpop.permute.xlu0 %275
    %vm278 = vcmask 523264
    %v280 = vsel %vm278, %v222, 0
    %v283 = vsel %vm278, %v223, 0
    %v286 = vsel %vm278, %v224, 0
    %v289 = vsel %vm278, %v225, 0
    %v292 = vsel %vm278, %v226, 0
    %v295 = vsel %vm278, %v227, 0
    %v298 = vsel %vm278, %v228, 0
    %v301 = vsel %vm278, %v229, 0
    %303 = vmatprep.subr.mxu0 0.0
    %304 = vmatpush1.msra.mxu0 0.0
    %305 = vmatprep.subr.mxu0 0.0
    %306 = vmatpush1.msra.mxu0 0.0
    %307 = vmatprep.subr.mxu0 0.0
    %308 = vmatpush1.msra.mxu0 0.0
    %309 = vmatprep.subr.mxu0 0.0
    %310 = vmatpush1.msra.mxu0 0.0
    %311 = vmatprep.subr.mxu0 0.0
    %312 = vmatpush1.msra.mxu0 0.0
    %313 = vmatprep.subr.mxu0 0.0
    %314 = vmatpush1.msra.mxu0 0.0
    %315 = vmatprep.subr.mxu0 0.0
    %316 = vmatpush1.msra.mxu0 0.0
    %317 = vmatprep.subr.mxu0 0.0
    %318 = vmatpush1.msra.mxu0 0.0
    %319 = vmatprep.subr.mxu0 0.0
    %320 = vmatpush1.msra.mxu0 %v221
    %321 = vmatprep.subr.mxu0 0.0
    %322 = vmatpush1.msra.mxu0 %v220
    %323 = vmatprep.subr.mxu0 0.0
    %324 = vmatpush1.msra.mxu0 %v219
    %325 = vmatprep.subr.mxu0 0.0
    %326 = vmatpush1.msra.mxu0 %v218
    %327 = vmatprep.subr.mxu0 0.0
    %328 = vmatpush1.msra.mxu0 %v217
    %329 = vmatprep.subr.mxu0 0.0
    %330 = vmatpush1.msra.mxu0 %v216
    %331 = vmatprep.subr.mxu0 0.0
    %332 = vmatpush1.msra.mxu0 %v215
    %333 = vmatprep.subr.mxu0 0.0
    %334 = vmatpush1.msra.mxu0 %v214
    %335 = vmatprep.subr.mxu0 0.0
    %336 = vmatpush2.msra.mxu0 0.0
    %337 = vmatprep.subr.mxu0 0.0
    %338 = vmatpush2.msra.mxu0 0.0
    %339 = vmatprep.subr.mxu0 0.0
    %340 = vmatpush2.msra.mxu0 0.0
    %341 = vmatprep.subr.mxu0 0.0
    %342 = vmatpush2.msra.mxu0 0.0
    %343 = vmatprep.subr.mxu0 0.0
    %344 = vmatpush2.msra.mxu0 0.0
    %345 = vmatprep.subr.mxu0 0.0
    %346 = vmatpush2.msra.mxu0 0.0
    %347 = vmatprep.subr.mxu0 0.0
    %348 = vmatpush2.msra.mxu0 0.0
    %349 = vmatprep.subr.mxu0 0.0
    %350 = vmatpush2.msra.mxu0 0.0
    %351 = vmatprep.subr.mxu0 0.0
    %352 = vmatpush2.msra.mxu0 0.0
    %353 = vmatprep.subr.mxu0 0.0
    %354 = vmatpush2.msra.mxu0 0.0
    %355 = vmatprep.subr.mxu0 0.0
    %356 = vmatpush2.msra.mxu0 0.0
    %357 = vmatprep.subr.mxu0 0.0
    %358 = vmatpush2.msra.mxu0 0.0
    %359 = vmatprep.subr.mxu0 0.0
    %360 = vmatpush2.msra.mxu0 0.0
    %361 = vmatprep.subr.mxu0 0.0
    %362 = vmatpush2.msra.mxu0 0.0
    %363 = vmatprep.subr.mxu0 0.0
    %364 = vmatpush2.msra.mxu0 0.0
    %365 = vmatprep.subr.mxu0 0.0
    %366 = vmatpush2.msra.mxu0 0.0
    %367 = vmatprep.mubr.f32.mxu0 0.0
    %368 = vmatmul.mubr.f32.gmra.mxu0 %v280
    %v369 = vpop.f32.mrf.mxu0
    %v370 = vadd.f32 %v241, %v369
    %v371 = vpop.f32.mrf.mxu0
    %372 = vmatprep.mubr.f32.mxu0 0.0
    %373 = vmatmul.mubr.f32.gmra.mxu0 %v283
    %v374 = vpop.f32.mrf.mxu0
    %v375 = vadd.f32 %v246, %v374
    %v376 = vpop.f32.mrf.mxu0
    %377 = vmatprep.mubr.f32.mxu0 0.0
    %378 = vmatmul.mubr.f32.gmra.mxu0 %v286
    %v379 = vpop.f32.mrf.mxu0
    %v380 = vadd.f32 %v251, %v379
    %v381 = vpop.f32.mrf.mxu0
    %382 = vmatprep.mubr.f32.mxu0 0.0
    %383 = vmatmul.mubr.f32.gmra.mxu0 %v289
    %v384 = vpop.f32.mrf.mxu0
    %v385 = vadd.f32 %v256, %v384
    %v386 = vpop.f32.mrf.mxu0
    %387 = vmatprep.mubr.f32.mxu0 0.0
    %388 = vmatmul.mubr.f32.gmra.mxu0 %v292
    %v389 = vpop.f32.mrf.mxu0
    %v390 = vadd.f32 %v261, %v389
    %v391 = vpop.f32.mrf.mxu0
    %392 = vmatprep.mubr.f32.mxu0 0.0
    %393 = vmatmul.mubr.f32.gmra.mxu0 %v295
    %v394 = vpop.f32.mrf.mxu0
    %v395 = vadd.f32 %v266, %v394
    %v396 = vpop.f32.mrf.mxu0
    %397 = vmatprep.mubr.f32.mxu0 0.0
    %398 = vmatmul.mubr.f32.gmra.mxu0 %v298
    %v399 = vpop.f32.mrf.mxu0
    %v400 = vadd.f32 %v271, %v399
    %v401 = vpop.f32.mrf.mxu0
    %402 = vmatprep.mubr.f32.mxu0 0.0
    %403 = vmatmul.mubr.f32.gmra.mxu0 %v301
    %v404 = vpop.f32.mrf.mxu0
    %v405 = vadd.f32 %v276, %v404
    %v406 = vpop.f32.mrf.mxu0
    %407 = vdwg.mxu0
    %v408 = vmax.f32 %v370, 0.0
    %v409 = vmax.f32 %v375, 0.0
    %v410 = vmax.f32 %v380, 0.0
    %v411 = vmax.f32 %v385, 0.0
    %v412 = vmax.f32 %v390, 0.0
    %v413 = vmax.f32 %v395, 0.0
    %v414 = vmax.f32 %v400, 0.0
    %v415 = vmax.f32 %v405, 0.0
    %v416 = vld [vmem:[%s5] sm:$0xff]
    %v417 = vld [vmem:[%s6] sm:$0xff]
    %419 = vset.pattern.permute.xlu0 0
    %420 = vperm.xlu0 %419, %v417
    %v421 = vpop.permute.xlu0 %420
    %v424 = vsel %vm278, %v416, 0
    %426 = vmatprep.subr.mxu0 0.0
    %427 = vmatpush1.msra.mxu0 0.0
    %428 = vmatprep.subr.mxu0 0.0
    %429 = vmatpush1.msra.mxu0 0.0
    %430 = vmatprep.subr.mxu0 0.0
    %431 = vmatpush1.msra.mxu0 0.0
    %432 = vmatprep.subr.mxu0 0.0
    %433 = vmatpush1.msra.mxu0 0.0
    %434 = vmatprep.subr.mxu0 0.0
    %435 = vmatpush1.msra.mxu0 0.0
    %436 = vmatprep.subr.mxu0 0.0
    %437 = vmatpush1.msra.mxu0 0.0
    %438 = vmatprep.subr.mxu0 0.0
    %439 = vmatpush1.msra.mxu0 0.0
    %440 = vmatprep.subr.mxu0 0.0
    %441 = vmatpush1.msra.mxu0 0.0
    %442 = vmatprep.subr.mxu0 0.0
    %443 = vmatpush1.msra.mxu0 %v415
    %444 = vmatprep.subr.mxu0 0.0
    %445 = vmatpush1.msra.mxu0 %v414
    %446 = vmatprep.subr.mxu0 0.0
    %447 = vmatpush1.msra.mxu0 %v413
    %448 = vmatprep.subr.mxu0 0.0
    %449 = vmatpush1.msra.mxu0 %v412
    %450 = vmatprep.subr.mxu0 0.0
    %451 = vmatpush1.msra.mxu0 %v411
    %452 = vmatprep.subr.mxu0 0.0
    %453 = vmatpush1.msra.mxu0 %v410
    %454 = vmatprep.subr.mxu0 0.0
    %455 = vmatpush1.msra.mxu0 %v409
    %456 = vmatprep.subr.mxu0 0.0
    %457 = vmatpush1.msra.mxu0 %v408
    %458 = vmatprep.subr.mxu0 0.0
    %459 = vmatpush2.msra.mxu0 0.0
    %460 = vmatprep.subr.mxu0 0.0
    %461 = vmatpush2.msra.mxu0 0.0
    %462 = vmatprep.subr.mxu0 0.0
    %463 = vmatpush2.msra.mxu0 0.0
    %464 = vmatprep.subr.mxu0 0.0
    %465 = vmatpush2.msra.mxu0 0.0
    %466 = vmatprep.subr.mxu0 0.0
    %467 = vmatpush2.msra.mxu0 0.0
    %468 = vmatprep.subr.mxu0 0.0
    %469 = vmatpush2.msra.mxu0 0.0
    %470 = vmatprep.subr.mxu0 0.0
    %471 = vmatpush2.msra.mxu0 0.0
    %472 = vmatprep.subr.mxu0 0.0
    %473 = vmatpush2.msra.mxu0 0.0
    %474 = vmatprep.subr.mxu0 0.0
    %475 = vmatpush2.msra.mxu0 0.0
    %476 = vmatprep.subr.mxu0 0.0
    %477 = vmatpush2.msra.mxu0 0.0
    %478 = vmatprep.subr.mxu0 0.0
    %479 = vmatpush2.msra.mxu0 0.0
    %480 = vmatprep.subr.mxu0 0.0
    %481 = vmatpush2.msra.mxu0 0.0
    %482 = vmatprep.subr.mxu0 0.0
    %483 = vmatpush2.msra.mxu0 0.0
    %484 = vmatprep.subr.mxu0 0.0
    %485 = vmatpush2.msra.mxu0 0.0
    %486 = vmatprep.subr.mxu0 0.0
    %487 = vmatpush2.msra.mxu0 0.0
    %488 = vmatprep.subr.mxu0 0.0
    %489 = vmatpush2.msra.mxu0 0.0
    %490 = vmatprep.mubr.f32.mxu0 0.0
    %491 = vmatmul.mubr.f32.gmra.mxu0 %v424
    %v492 = vpop.f32.mrf.mxu0
    %v493 = vadd.f32 %v421, %v492
    %v494 = vpop.f32.mrf.mxu0
    %495 = vdwg.mxu0
    %496 = vst [vmem:[#allocation2] sm:$0xff] %v493
    // Predicated region
    $region30: #{tpu_custom_call.1} parent=1 // pred_check
      _
    $region31: #{tpu_custom_call.1} parent=1 // pred_check_branch
      %498 = sbr.rel (0) target = $region33
    $region32: #{tpu_custom_call.1} parent=1 // pred_region
      %s500 = ssub.s32 128, 128
      %501 = vsyncadd [#allocation3], %s500
      %s503 = sshll.u32 [#allocation2], 4
      %s504 = int_to_ptr.vmem [resolvable:$true] %s503
      %506 = dma.vmem_to_hbm [thread:$0]  %s504, 128, %s7, [#allocation3]
    $region33: #{tpu_custom_call.1} parent=1 // pred_fallthru
      _
    // Predicated region
    $region34: #{tpu_custom_call.1} parent=1 // pred_check
      _
    $region35: #{tpu_custom_call.1} parent=1 // pred_check_branch
      %508 = sbr.rel (0) target = $region37
    $region36: #{tpu_custom_call.1} parent=1 // pred_region
      %509 = dma.done [#allocation3], 128
    $region37: #{tpu_custom_call.1} parent=1 // pred_fallthru
      _
    %510 = vsyncpa [#allocation3], 1

</llo_original>
